<compile_context>
chip_gen: v7x
topology: tpu7x:2x2x1
jax: 0.10.0
libtpu: 0.0.40
codegen_flags: <defaults>
</compile_context>

<pallas_src>
import jax
import jax.numpy as jnp
from jax.experimental import pallas as pl
from jax.experimental.pallas import tpu as pltpu

LANE = 128


def _round_up(x, m):
    return (x + m - 1) // m * m


def autoencoder_kernel(x_ref, w1_ref, b1_ref, w2_ref, b2_ref, o_ref):
    # Fused: Linear1 -> ReLU -> Linear2 -> Sigmoid on one batch tile.
    x = x_ref[...].astype(jnp.bfloat16)                                   # (tb, in_dim) bf16
    h = jnp.dot(x, w1_ref[...], preferred_element_type=jnp.float32)       # (tb, out_p) f32
    h = jnp.maximum(h + b1_ref[...], 0.0)                                 # ReLU in f32
    y = jnp.dot(h.astype(jnp.bfloat16), w2_ref[...],
                preferred_element_type=jnp.float32)                       # (tb, in_dim) f32
    y = y + b2_ref[...]
    # Exact sigmoid via a single EUP tanh (co-issues with MXU/VPU slots).
    o_ref[...] = (0.5 * jnp.tanh(0.5 * y) + 0.5).astype(o_ref.dtype)


def _pick_tile(B, tile_b):
    # Big tiles amortize per-grid-step overhead; keep >= 2 grid steps when the batch is big
    # enough so v7x's 2 TensorCores both get work on the "parallel" batch axis.
    tb = min(tile_b, _round_up(pl.cdiv(B, 2), 8))
    if tb >= B:
        tb = B  # single block == full array dim (always a legal block shape)
    return max(tb, 1)


def autoencoder_forward(x, w1, b1, w2, b2, *, tile_b=2048):
    """x: (B, in_dim); w1: (out_dim, in_dim); b1: (out_dim,);
    w2: (in_dim, out_dim); b2: (in_dim,)  -- PyTorch nn.Linear conventions."""
    B, in_dim = x.shape
    out_dim = w1.shape[0]

    # Hidden dim padded to a lane multiple so the hidden activation is lane-dense; the
    # contraction/output feature dim stays at in_dim (block == full array dim is legal).
    out_p = _round_up(out_dim, LANE)
    tb = _pick_tile(B, tile_b)

    # Weights/biases only: transpose + zero-pad + cast (tiny, one-time). Padded columns of
    # W1^T / b1 are zero -> hidden padding is exactly zero after ReLU -> no effect on y.
    w1t = jnp.zeros((in_dim, out_p), jnp.bfloat16).at[:, :out_dim].set(
        w1.T.astype(jnp.bfloat16))
    b1p = jnp.zeros((1, out_p), jnp.float32).at[0, :out_dim].set(b1.astype(jnp.float32))
    w2t = jnp.zeros((out_p, in_dim), jnp.bfloat16).at[:out_dim, :].set(
        w2.T.astype(jnp.bfloat16))
    b2p = b2.astype(jnp.float32).reshape(1, in_dim)

    grid = (pl.cdiv(B, tb),)
    return pl.pallas_call(
        autoencoder_kernel,
        out_shape=jax.ShapeDtypeStruct((B, in_dim), x.dtype),
        grid=grid,
        in_specs=[
            pl.BlockSpec((tb, in_dim), lambda i: (i, 0)),     # x tile (streams per step)
            pl.BlockSpec((in_dim, out_p), lambda i: (0, 0)),  # W1^T (resident, fetched once)
            pl.BlockSpec((1, out_p), lambda i: (0, 0)),       # b1
            pl.BlockSpec((out_p, in_dim), lambda i: (0, 0)),  # W2^T (resident, fetched once)
            pl.BlockSpec((1, in_dim), lambda i: (0, 0)),      # b2
        ],
        out_specs=pl.BlockSpec((tb, in_dim), lambda i: (i, 0)),
        compiler_params=pltpu.CompilerParams(
            dimension_semantics=("parallel",),                # batch axis shards over TCs
        ),
    )(x, w1t, b1p, w2t, b2p)


def _reference(x, w1, b1, w2, b2):
    h = jnp.maximum(x @ w1.T + b1, 0.0)
    return jax.nn.sigmoid(h @ w2.T + b2)


if __name__ == "__main__":
    # Small shapes consistent with AutoEncoder(in_dim, out_dim); B is deliberately not a
    # multiple of the tile (exercises the ragged last block) and feature dims are < 128.
    B, in_dim, out_dim = 50, 64, 32

    key = jax.random.PRNGKey(0)
    kx, k1, k2, k3, k4 = jax.random.split(key, 5)

    x = jax.random.uniform(kx, (B, in_dim), dtype=jnp.float32)

    # PyTorch nn.Linear shapes: W = (out, in), b = (out,).
    bound1 = 1.0 / jnp.sqrt(in_dim)
    bound2 = 1.0 / jnp.sqrt(out_dim)
    w1 = jax.random.uniform(k1, (out_dim, in_dim), minval=-bound1, maxval=bound1, dtype=jnp.float32)
    b1 = jax.random.uniform(k2, (out_dim,), minval=-bound1, maxval=bound1, dtype=jnp.float32)
    w2 = jax.random.uniform(k3, (in_dim, out_dim), minval=-bound2, maxval=bound2, dtype=jnp.float32)
    b2 = jax.random.uniform(k4, (in_dim,), minval=-bound2, maxval=bound2, dtype=jnp.float32)

    out = autoencoder_forward(x, w1, b1, w2, b2)
    out = jax.block_until_ready(out)

    ref = _reference(x, w1, b1, w2, b2)
    assert out.shape == (B, in_dim)
    assert out.dtype == x.dtype
    # bf16 matmul operands -> looser tolerance than an all-f32 path (sigmoid itself is exact).
    assert jnp.allclose(out, ref, atol=2e-2, rtol=2e-2), float(jnp.max(jnp.abs(out - ref)))

    print("KERNEL_OK")
</pallas_src>

<mosaic_0001>
module attributes {stable_mosaic.version = 11 : i64} {
  func.func @autoencoder_kernel(%arg0: i32, %arg1: memref<32x64xf32, #tpu.memory_space<vmem>>, %arg2: memref<64x128xbf16, #tpu.memory_space<vmem>>, %arg3: memref<1x128xf32, #tpu.memory_space<vmem>>, %arg4: memref<128x64xbf16, #tpu.memory_space<vmem>>, %arg5: memref<1x64xf32, #tpu.memory_space<vmem>>, %arg6: memref<32x64xf32, #tpu.memory_space<vmem>>) attributes {dimension_semantics = [#tpu.dimension_semantics<parallel>], iteration_bounds = array<i64: 2>, scalar_prefetch = 0 : i64, scratch_operands = 0 : i64, tpu.core_type = #tpu.core_type<tc>, window_params = [{transform_indices = @transform_0, window_bounds = array<i64: 32, 64>}, {pipeline_mode = #tpu.pipeline_mode<synchronous>, transform_indices = @transform_1, window_bounds = array<i64: 64, 128>}, {pipeline_mode = #tpu.pipeline_mode<synchronous>, transform_indices = @transform_2, window_bounds = array<i64: 1, 128>}, {pipeline_mode = #tpu.pipeline_mode<synchronous>, transform_indices = @transform_3, window_bounds = array<i64: 128, 64>}, {pipeline_mode = #tpu.pipeline_mode<synchronous>, transform_indices = @transform_4, window_bounds = array<i64: 1, 64>}, {transform_indices = @transform_5, window_bounds = array<i64: 32, 64>}]} {
    %c0 = arith.constant 0 : index
    %c0_0 = arith.constant 0 : index
    %0 = vector.load %arg1[%c0, %c0_0] : memref<32x64xf32, #tpu.memory_space<vmem>>, vector<32x64xf32>
    %1 = arith.truncf %0 : vector<32x64xf32> to vector<32x64xbf16>
    %c0_1 = arith.constant 0 : index
    %c0_2 = arith.constant 0 : index
    %2 = vector.load %arg2[%c0_1, %c0_2] : memref<64x128xbf16, #tpu.memory_space<vmem>>, vector<64x128xbf16>
    %cst = arith.constant dense<0.000000e+00> : vector<32x128xf32>
    %3 = tpu.matmul %1, %2, %cst {dimension_numbers = #tpu.dot_dimension_numbers<[1], [0], [0], [1], [0, 0, 1, 1], [], []>} : vector<32x64xbf16>, vector<64x128xbf16>, vector<32x128xf32> -> vector<32x128xf32>
    %c0_3 = arith.constant 0 : index
    %c0_4 = arith.constant 0 : index
    %4 = vector.load %arg3[%c0_3, %c0_4] : memref<1x128xf32, #tpu.memory_space<vmem>>, vector<1x128xf32>
    %5 = vector.broadcast %4 : vector<1x128xf32> to vector<32x128xf32>
    %6 = arith.addf %3, %5 : vector<32x128xf32>
    %cst_5 = arith.constant 0.000000e+00 : f32
    %7 = vector.broadcast %cst_5 : f32 to vector<32x128xf32>
    %8 = arith.maximumf %6, %7 : vector<32x128xf32>
    %9 = arith.truncf %8 : vector<32x128xf32> to vector<32x128xbf16>
    %c0_6 = arith.constant 0 : index
    %c0_7 = arith.constant 0 : index
    %10 = vector.load %arg4[%c0_6, %c0_7] : memref<128x64xbf16, #tpu.memory_space<vmem>>, vector<128x64xbf16>
    %cst_8 = arith.constant dense<0.000000e+00> : vector<32x64xf32>
    %11 = tpu.matmul %9, %10, %cst_8 {dimension_numbers = #tpu.dot_dimension_numbers<[1], [0], [0], [1], [0, 0, 1, 1], [], []>} : vector<32x128xbf16>, vector<128x64xbf16>, vector<32x64xf32> -> vector<32x64xf32>
    %c0_9 = arith.constant 0 : index
    %c0_10 = arith.constant 0 : index
    %12 = vector.load %arg5[%c0_9, %c0_10] : memref<1x64xf32, #tpu.memory_space<vmem>>, vector<1x64xf32>
    %13 = vector.broadcast %12 : vector<1x64xf32> to vector<32x64xf32>
    %14 = arith.addf %11, %13 : vector<32x64xf32>
    %cst_11 = arith.constant 5.000000e-01 : f32
    %15 = vector.broadcast %cst_11 : f32 to vector<32x64xf32>
    %16 = arith.mulf %15, %14 : vector<32x64xf32>
    %17 = math.tanh %16 : vector<32x64xf32>
    %cst_12 = arith.constant 5.000000e-01 : f32
    %18 = vector.broadcast %cst_12 : f32 to vector<32x64xf32>
    %19 = arith.mulf %18, %17 : vector<32x64xf32>
    %cst_13 = arith.constant 5.000000e-01 : f32
    %20 = vector.broadcast %cst_13 : f32 to vector<32x64xf32>
    %21 = arith.addf %19, %20 : vector<32x64xf32>
    %c0_14 = arith.constant 0 : index
    %c0_15 = arith.constant 0 : index
    %22 = vector.load %arg6[%c0_14, %c0_15] : memref<32x64xf32, #tpu.memory_space<vmem>>, vector<32x64xf32>
    tpu.vector_store %arg6[%c0_14, %c0_15], %21 {strides = array<i32>} : memref<32x64xf32, #tpu.memory_space<vmem>>, vector<32x64xf32>,
    return
  }
  func.func @transform_0(%arg0: i32) -> (i32, i32) {
    %c0_i32 = arith.constant 0 : i32
    %c0_i32_0 = arith.constant 0 : i32
    return %arg0, %c0_i32 : i32, i32
  }
  func.func @transform_1(%arg0: i32) -> (i32, i32) {
    %c0_i32 = arith.constant 0 : i32
    %c0_i32_0 = arith.constant 0 : i32
    %c0_i32_1 = arith.constant 0 : i32
    return %c0_i32, %c0_i32_0 : i32, i32
  }
  func.func @transform_2(%arg0: i32) -> (i32, i32) {
    %c0_i32 = arith.constant 0 : i32
    %c0_i32_0 = arith.constant 0 : i32
    %c0_i32_1 = arith.constant 0 : i32
    return %c0_i32, %c0_i32_0 : i32, i32
  }
  func.func @transform_3(%arg0: i32) -> (i32, i32) {
    %c0_i32 = arith.constant 0 : i32
    %c0_i32_0 = arith.constant 0 : i32
    %c0_i32_1 = arith.constant 0 : i32
    return %c0_i32, %c0_i32_0 : i32, i32
  }
  func.func @transform_4(%arg0: i32) -> (i32, i32) {
    %c0_i32 = arith.constant 0 : i32
    %c0_i32_0 = arith.constant 0 : i32
    %c0_i32_1 = arith.constant 0 : i32
    return %c0_i32, %c0_i32_0 : i32, i32
  }
  func.func @transform_5(%arg0: i32) -> (i32, i32) {
    %c0_i32 = arith.constant 0 : i32
    %c0_i32_0 = arith.constant 0 : i32
    return %arg0, %c0_i32 : i32, i32
  }
}

</mosaic_0001>

<llo_original>
// kernel: tpu_custom_call.1
$region0: #{tpu_custom_call.1}
  #allocation0 [shape = 'u32[]', space=smem, size = 0x4, offset = 0x4, fixed_abs, tag = 'smem constant byte address 0x4 - core index']
  #allocation1 [shape = 'u32[144,128]{1,0:T(1,128)}', space=vmem, size = 0x12000, scoped, tag = 'internal scratch']
  %s0 = inlined_call_operand.vmem [shape: f32[50,64], index: 0, kind: input, shape index: {}]
  %s1 = inlined_call_operand.vmem [shape: bf16[64,128], index: 1, kind: input, shape index: {}]
  %s2 = inlined_call_operand.vmem [shape: f32[1,128], index: 2, kind: input, shape index: {}]
  %s3 = inlined_call_operand.vmem [shape: bf16[128,64], index: 3, kind: input, shape index: {}]
  %s4 = inlined_call_operand.vmem [shape: f32[1,64], index: 4, kind: input, shape index: {}]
  %s5 = inlined_call_operand.hbm [shape: f32[50,64], index: 5, kind: output, shape index: {}]
  %s6 = sld [smem:[#allocation0]]
  $region53: #{tpu_custom_call.1} parent=0
    _
  %s8 = ssub.s32 1, %s6
  %s9 = scalar_select 0, %s8, %s6
  $region1: #{tpu_custom_call.1} parent=0
    #allocation2 [shape = 'u8[32768]{0}', space=vmem, size = 0x8000, scoped, tag = 'output window, operand 0']
    #allocation3 [shape = 's32[2]{0}', space=sflag, size = 0x8, scoped, tag = 'scoped memory for tpu_custom_call.1']
    %10 = vsyncpa [#allocation3], 0
    %s11 = scalar_lea.sflag [#allocation3], 1
    %12 = vsyncpa %s11, 0
    loop: start=0, step=1, limit=4
    $region2: #{tpu_custom_call.1} parent=1 // loop_pre_header
      _
    $region3: #{tpu_custom_call.1} parent=1 // loop_header
      %s14 = sphi 0, %s18
      %p15 = scmp.ge.s32.totalorder %s14, 4
      %s24 = sphi 0, %s26
      %s27 = sphi 0, %s24
      %s28 = sphi 0, %s27
      %s44 = sphi 0, %s28
      %s48 = sphi 0, %s48
      %s50 = sphi 0, %s48
      %s51 = sphi 0, %s50
      %s65 = sphi 0, %s51
      %s69 = sphi 0, %s69
      %s71 = sphi 0, %s69
      %s72 = sphi 0, %s71
      %s86 = sphi 0, %s72
      %s90 = sphi 0, %s90
      %s92 = sphi 0, %s90
      %s93 = sphi 0, %s92
      %s107 = sphi 0, %s93
      %s111 = sphi 0, %s111
      %s113 = sphi 0, %s111
      %s114 = sphi 0, %s113
      %s128 = sphi 0, %s114
      %s134 = sphi 0, %s136
      %s137 = sphi 0, %s134
      %s138 = sphi 0, %s137
      %s154 = sphi 0, %s138
    $region4: #{tpu_custom_call.1} parent=1 // loop_header_branch
      %17 = sbr.rel (%p15) target = $region8
    $region5: #{tpu_custom_call.1} parent=1 // loop_body
      %s19 = ssub.s32 %s14, 1
      %s20 = ssub.s32 %s14, 2
      %s21 = sadd.s32 %s14, 1
      %s22 = ssub.s32 %s14, %s21
      %p23 = scmp.eq.s32.totalorder %s22, 0
      %s25 = sadd.s32 %s24, 1
      %s26 = scalar_select %p23, %s24, %s25
      %p29 = pneg %p23
      %p30 = scmp.eq.s32.totalorder %s14, 1
      %p31 = por %p29, %p30
      %p32 = scmp.ne.s32.totalorder %s24, %s27
      %p33 = scmp.eq.s32.totalorder %s14, 0
      %p34 = por %p32, %p33
      %p35 = scmp.ne.s32.totalorder %s24, %s27
      %p36 = scmp.eq.s32.totalorder %s19, 1
      %p37 = por %p35, %p36
      %p38 = scmp.ne.s32.totalorder %s27, %s28
      %p39 = scmp.eq.s32.totalorder %s19, 0
      %p40 = por %p38, %p39
      %p41 = scmp.ne.s32.totalorder %s27, %s28
      %p42 = scmp.eq.s32.totalorder %s20, 1
      %p43 = por %p41, %p42
      %p45 = scmp.ne.s32.totalorder %s28, %s44
      %p46 = scmp.eq.s32.totalorder %s20, 0
      %p47 = por %p45, %p46
      %s49 = sadd.s32 %s48, 1
      %p52 = scmp.eq.s32.totalorder %s14, 1
      %p53 = scmp.ne.s32.totalorder %s48, %s50
      %p54 = scmp.eq.s32.totalorder %s14, 0
      %p55 = por %p53, %p54
      %p56 = scmp.ne.s32.totalorder %s48, %s50
      %p57 = scmp.eq.s32.totalorder %s19, 1
      %p58 = por %p56, %p57
      %p59 = scmp.ne.s32.totalorder %s50, %s51
      %p60 = scmp.eq.s32.totalorder %s19, 0
      %p61 = por %p59, %p60
      %p62 = scmp.ne.s32.totalorder %s50, %s51
      %p63 = scmp.eq.s32.totalorder %s20, 1
      %p64 = por %p62, %p63
      %p66 = scmp.ne.s32.totalorder %s51, %s65
      %p67 = scmp.eq.s32.totalorder %s20, 0
      %p68 = por %p66, %p67
      %s70 = sadd.s32 %s69, 1
      %p73 = scmp.eq.s32.totalorder %s14, 1
      %p74 = scmp.ne.s32.totalorder %s69, %s71
      %p75 = scmp.eq.s32.totalorder %s14, 0
      %p76 = por %p74, %p75
      %p77 = scmp.ne.s32.totalorder %s69, %s71
      %p78 = scmp.eq.s32.totalorder %s19, 1
      %p79 = por %p77, %p78
      %p80 = scmp.ne.s32.totalorder %s71, %s72
      %p81 = scmp.eq.s32.totalorder %s19, 0
      %p82 = por %p80, %p81
      %p83 = scmp.ne.s32.totalorder %s71, %s72
      %p84 = scmp.eq.s32.totalorder %s20, 1
      %p85 = por %p83, %p84
      %p87 = scmp.ne.s32.totalorder %s72, %s86
      %p88 = scmp.eq.s32.totalorder %s20, 0
      %p89 = por %p87, %p88
      %s91 = sadd.s32 %s90, 1
      %p94 = scmp.eq.s32.totalorder %s14, 1
      %p95 = scmp.ne.s32.totalorder %s90, %s92
      %p96 = scmp.eq.s32.totalorder %s14, 0
      %p97 = por %p95, %p96
      %p98 = scmp.ne.s32.totalorder %s90, %s92
      %p99 = scmp.eq.s32.totalorder %s19, 1
      %p100 = por %p98, %p99
      %p101 = scmp.ne.s32.totalorder %s92, %s93
      %p102 = scmp.eq.s32.totalorder %s19, 0
      %p103 = por %p101, %p102
      %p104 = scmp.ne.s32.totalorder %s92, %s93
      %p105 = scmp.eq.s32.totalorder %s20, 1
      %p106 = por %p104, %p105
      %p108 = scmp.ne.s32.totalorder %s93, %s107
      %p109 = scmp.eq.s32.totalorder %s20, 0
      %p110 = por %p108, %p109
      %s112 = sadd.s32 %s111, 1
      %p115 = scmp.eq.s32.totalorder %s14, 1
      %p116 = scmp.ne.s32.totalorder %s111, %s113
      %p117 = scmp.eq.s32.totalorder %s14, 0
      %p118 = por %p116, %p117
      %p119 = scmp.ne.s32.totalorder %s111, %s113
      %p120 = scmp.eq.s32.totalorder %s19, 1
      %p121 = por %p119, %p120
      %p122 = scmp.ne.s32.totalorder %s113, %s114
      %p123 = scmp.eq.s32.totalorder %s19, 0
      %p124 = por %p122, %p123
      %p125 = scmp.ne.s32.totalorder %s113, %s114
      %p126 = scmp.eq.s32.totalorder %s20, 1
      %p127 = por %p125, %p126
      %p129 = scmp.ne.s32.totalorder %s114, %s128
      %p130 = scmp.eq.s32.totalorder %s20, 0
      %p131 = por %p129, %p130
      %s132 = ssub.s32 %s14, %s21
      %p133 = scmp.eq.s32.totalorder %s132, 0
      %s135 = sadd.s32 %s134, 1
      %s136 = scalar_select %p133, %s134, %s135
      %p139 = pneg %p133
      %p140 = scmp.eq.s32.totalorder %s14, 1
      %p141 = por %p139, %p140
      %p142 = scmp.ne.s32.totalorder %s134, %s137
      %p143 = scmp.eq.s32.totalorder %s14, 0
      %p144 = por %p142, %p143
      %p145 = scmp.ne.s32.totalorder %s134, %s137
      %p146 = scmp.eq.s32.totalorder %s19, 1
      %p147 = por %p145, %p146
      %p148 = scmp.ne.s32.totalorder %s137, %s138
      %p149 = scmp.eq.s32.totalorder %s19, 0
      %p150 = por %p148, %p149
      %p151 = scmp.ne.s32.totalorder %s137, %s138
      %p152 = scmp.eq.s32.totalorder %s20, 1
      %p153 = por %p151, %p152
      %p155 = scmp.ne.s32.totalorder %s138, %s154
      %p156 = scmp.eq.s32.totalorder %s20, 0
      %p157 = por %p155, %p156
      %p158 = scmp.le.s32.totalorder 1, %s14
      %p159 = scmp.lt.s32.totalorder %s14, 3
      %p160 = pnand %p158, %p159
      %p161 = pneg %p160
      // Predicated region
      $region9: #{tpu_custom_call.1} parent=5 // pred_check
        _
      $region10: #{tpu_custom_call.1} parent=5 // pred_check_branch
        %163 = sbr.rel (%p160) target = $region12
      $region11: #{tpu_custom_call.1} parent=5 // pred_region
        %s164 = ssub.s32 %s14, 1
        // Predicated region
        $region13: #{tpu_custom_call.1} parent=11 // pred_check
          %p165 = pneg %p61
        $region14: #{tpu_custom_call.1} parent=11 // pred_check_branch
          %167 = sbr.rel (%p165) target = $region16
        $region15: #{tpu_custom_call.1} parent=11 // pred_region
          _
        $region16: #{tpu_custom_call.1} parent=11 // pred_fallthru
          _
        // Predicated region
        $region17: #{tpu_custom_call.1} parent=11 // pred_check
          %p168 = pneg %p82
        $region18: #{tpu_custom_call.1} parent=11 // pred_check_branch
          %170 = sbr.rel (%p168) target = $region20
        $region19: #{tpu_custom_call.1} parent=11 // pred_region
          _
        $region20: #{tpu_custom_call.1} parent=11 // pred_fallthru
          _
        // Predicated region
        $region21: #{tpu_custom_call.1} parent=11 // pred_check
          %p171 = pneg %p103
        $region22: #{tpu_custom_call.1} parent=11 // pred_check_branch
          %173 = sbr.rel (%p171) target = $region24
        $region23: #{tpu_custom_call.1} parent=11 // pred_region
          _
        $region24: #{tpu_custom_call.1} parent=11 // pred_fallthru
          _
        // Predicated region
        $region25: #{tpu_custom_call.1} parent=11 // pred_check
          %p174 = pneg %p124
        $region26: #{tpu_custom_call.1} parent=11 // pred_check_branch
          %176 = sbr.rel (%p174) target = $region28
        $region27: #{tpu_custom_call.1} parent=11 // pred_region
          _
        $region28: #{tpu_custom_call.1} parent=11 // pred_fallthru
          _
      $region12: #{tpu_custom_call.1} parent=5 // pred_fallthru
        _
      %p177 = scmp.lt.s32.totalorder %s14, 2
      // Predicated region
      $region29: #{tpu_custom_call.1} parent=5 // pred_check
        %p178 = pneg %p177
      $region30: #{tpu_custom_call.1} parent=5 // pred_check_branch
        %180 = sbr.rel (%p178) target = $region32
      $region31: #{tpu_custom_call.1} parent=5 // pred_region
        // Predicated region
        $region33: #{tpu_custom_call.1} parent=31 // pred_check
          %p181 = pneg %p34
        $region34: #{tpu_custom_call.1} parent=31 // pred_check_branch
          %183 = sbr.rel (%p181) target = $region36
        $region35: #{tpu_custom_call.1} parent=31 // pred_region
          %s184 = smul.u32 4, %s14
          %s185 = ssub.s32 7, %s184
          %p186 = scmp.lt.s32.totalorder %s185, 4
          %s187 = scalar_select %p186, %s185, 4
          %s188 = smul.u32 128, %s187
          %p189 = scmp.lt.s32.totalorder %s184, 6
          %s190 = scalar_select %p189, %s184, 6
          %s191 = smul.addr %s190, 8
          %s192 = scalar_lea.vmem %s0, %s191
          %s193 = smul.u32 4, %s14
          %s194 = ssub.s32 7, %s193
          %p195 = scmp.lt.s32.totalorder %s194, 4
          %s196 = scalar_select %p195, %s194, 4
          %s197 = smul.u32 128, %s196
        $region36: #{tpu_custom_call.1} parent=31 // pred_fallthru
          _
      $region32: #{tpu_custom_call.1} parent=5 // pred_fallthru
        _
      %p198 = scmp.le.s32.totalorder 1, %s14
      %p199 = scmp.lt.s32.totalorder %s14, 3
      %p200 = pnand %p198, %p199
      %p201 = pneg %p200
      // Predicated region
      $region37: #{tpu_custom_call.1} parent=5 // pred_check
        _
      $region38: #{tpu_custom_call.1} parent=5 // pred_check_branch
        %203 = sbr.rel (%p200) target = $region40
      $region39: #{tpu_custom_call.1} parent=5 // pred_region
        %s204 = ssub.s32 %s14, 1
        %s205 = smul.u32 4, %s19
        %s206 = ssub.s32 7, %s205
        %p207 = scmp.lt.s32.totalorder %s206, 4
        %s208 = scalar_select %p207, %s206, 4
        %s209 = smul.u32 128, %s208
        %p210 = scmp.lt.s32.totalorder %s205, 6
        %s211 = scalar_select %p210, %s205, 6
        %s212 = smul.addr %s211, 8
        %s213 = scalar_lea.vmem %s0, %s212
        %p214 = pneg %p40
        %p215 = pneg %p37
        %p216 = pneg %p61
        %p217 = pneg %p58
        %p218 = pneg %p82
        %p219 = pneg %p79
        %p220 = pneg %p103
        %p221 = pneg %p100
        %p222 = pneg %p124
        %p223 = pneg %p121
        %p224 = pneg %p150
        %p225 = pneg %p147
        %s226 = sand.u32 %s137, 1
        %s227 = scalar_lea.sflag [#allocation3], %s226
        %s228 = sand.u32 %s137, 1
        %s229 = smul.addr %s228, 32
        %s230 = scalar_lea.vmem [#allocation2], %s229
        %s231 = smul.u32 4, %s19
        %s232 = ssub.s32 7, %s231
        %p233 = scmp.lt.s32.totalorder %s232, 4
        %s234 = scalar_select %p233, %s232, 4
        %s235 = smul.u32 128, %s234
        %p236 = scmp.lt.s32.totalorder %s231, 6
        %s237 = scalar_select %p236, %s231, 6
        %s238 = smul.addr %s237, 8
        %s239 = scalar_lea.vmem %s0, %s238
        %s240 = smul.u32 4, %s19
        %s241 = ssub.s32 7, %s240
        %p242 = scmp.lt.s32.totalorder %s241, 4
        %s243 = scalar_select %p242, %s241, 4
        %s244 = smul.u32 128, %s243
        %s245 = smul.u32 4, %s19
        %s246 = ssub.s32 7, %s245
        %p247 = scmp.lt.s32.totalorder %s246, 4
        %s248 = scalar_select %p247, %s246, 4
        %s249 = smul.u32 128, %s248
        %v251 = vld [vmem:[%s239] sm:$0xff]
        %v252 = vld [vmem:[%s239 + $0x8] sm:$0xff]
        %v253 = vld [vmem:[%s239 + $0x10] sm:$0xff]
        %v254 = vld [vmem:[%s239 + $0x18] sm:$0xff]
        %v255 = vpack.c.bf16 %v252, %v251
        %v256 = vpack.c.bf16 %v254, %v253
        %v257 = vld [vmem:[%s1] sm:$0xf]
        %v258 = vld [vmem:[%s1 + $0x4] sm:$0xf]
        %v259 = vld [vmem:[%s1 + $0x8] sm:$0xf]
        %v260 = vld [vmem:[%s1 + $0xc] sm:$0xf]
        %v261 = vld [vmem:[%s1 + $0x10] sm:$0xf]
        %v262 = vld [vmem:[%s1 + $0x14] sm:$0xf]
        %v263 = vld [vmem:[%s1 + $0x18] sm:$0xf]
        %v264 = vld [vmem:[%s1 + $0x1c] sm:$0xf]
        %v265 = vld [vmem:[%s2] sm:$0x1]
        %v267 = vlaneseq
        %v268 = vshrl.u32 %v267, 7
        %v269 = vsub.s32 0, %v268
        %v270 = vrot.slane %v265, %v269
        %v280 = vunpack.c.l.b16 %v257
        %v281 = vunpack.c.l.b16 %v258
        %v282 = vunpack.c.l.b16 %v259
        %v283 = vunpack.c.l.b16 %v260
        %v284 = vunpack.c.l.b16 %v261
        %v285 = vunpack.c.l.b16 %v262
        %v286 = vunpack.c.l.b16 %v263
        %v287 = vunpack.c.l.b16 %v264
        %v288 = vpack.c.b16 %v281, %v280
        %v289 = vpack.c.b16 %v283, %v282
        %v290 = vpack.c.b16 %v285, %v284
        %v291 = vpack.c.b16 %v287, %v286
        %vm296 = vcmask 523264
        %v298 = vsel %vm296, %v255, 0
        %v301 = vsel %vm296, %v256, 0
        %303 = vmatprep.subr.bf16.mxu0 0
        %304 = vmatpush1.bf16.msra.mxu0 %v288
        %305 = vmatprep.subr.bf16.mxu0 0
        %306 = vmatpush1.bf16.msra.mxu0 %v289
        %307 = vmatprep.subr.bf16.mxu0 0
        %308 = vmatpush1.bf16.msra.mxu0 %v290
        %309 = vmatprep.subr.bf16.mxu0 0
        %310 = vmatpush1.bf16.msra.mxu0 %v291
        %311 = vmatprep.subr.bf16.mxu0 0
        %312 = vmatpush1.bf16.msra.mxu0 0
        %313 = vmatprep.subr.bf16.mxu0 0
        %314 = vmatpush1.bf16.msra.mxu0 0
        %315 = vmatprep.subr.bf16.mxu0 0
        %316 = vmatpush1.bf16.msra.mxu0 0
        %317 = vmatprep.subr.bf16.mxu0 0
        %318 = vmatpush1.bf16.msra.mxu0 0
        %319 = vmatprep.subr.bf16.mxu0 0
        %320 = vmatpush1.bf16.msra.mxu0 0
        %321 = vmatprep.subr.bf16.mxu0 0
        %322 = vmatpush1.bf16.msra.mxu0 0
        %323 = vmatprep.subr.bf16.mxu0 0
        %324 = vmatpush1.bf16.msra.mxu0 0
        %325 = vmatprep.subr.bf16.mxu0 0
        %326 = vmatpush1.bf16.msra.mxu0 0
        %327 = vmatprep.subr.bf16.mxu0 0
        %328 = vmatpush1.bf16.msra.mxu0 0
        %329 = vmatprep.subr.bf16.mxu0 0
        %330 = vmatpush1.bf16.msra.mxu0 0
        %331 = vmatprep.subr.bf16.mxu0 0
        %332 = vmatpush1.bf16.msra.mxu0 0
        %333 = vmatprep.subr.bf16.mxu0 0
        %334 = vmatpush1.bf16.msra.mxu0 0
        %335 = vmatprep.mubr.bf16.mxu0 0
        %336 = vmatmul.mubr.bf16.gmra.mrb[0].mxu0 %v298
        %v337 = vpop.f32.mrb[0].mxu0
        %v338 = vadd.f32 %v270, %v337
        %v339 = vpop.f32.mrb[0].mxu0
        %v340 = vpop.f32.mrb[0].mxu0
        %v341 = vadd.f32 %v270, %v340
        %v342 = vpop.f32.mrb[0].mxu0
        %343 = vmatprep.mubr.bf16.mxu0 0
        %344 = vmatmul.mubr.bf16.gmra.mrb[0].mxu0 %v301
        %v345 = vpop.f32.mrb[0].mxu0
        %v346 = vadd.f32 %v270, %v345
        %v347 = vpop.f32.mrb[0].mxu0
        %v348 = vpop.f32.mrb[0].mxu0
        %v349 = vadd.f32 %v270, %v348
        %v350 = vpop.f32.mrb[0].mxu0
        %351 = vdwg.mxu0
        %v352 = vmax.f32 %v338, 0.0
        %v353 = vmax.f32 %v341, 0.0
        %v354 = vmax.f32 %v346, 0.0
        %v355 = vmax.f32 %v349, 0.0
        %v356 = vpack.c.bf16 %v353, %v352
        %v357 = vpack.c.bf16 %v355, %v354
        %v358 = vld [vmem:[%s3] sm:$0xf]
        %v359 = vld [vmem:[%s3 + $0x4] sm:$0xf]
        %v360 = vld [vmem:[%s3 + $0x8] sm:$0xf]
        %v361 = vld [vmem:[%s3 + $0xc] sm:$0xf]
        %v362 = vld [vmem:[%s3 + $0x10] sm:$0xf]
        %v363 = vld [vmem:[%s3 + $0x14] sm:$0xf]
        %v364 = vld [vmem:[%s3 + $0x18] sm:$0xf]
        %v365 = vld [vmem:[%s3 + $0x1c] sm:$0xf]
        %v366 = vld [vmem:[%s3 + $0x20] sm:$0xf]
        %v367 = vld [vmem:[%s3 + $0x24] sm:$0xf]
        %v368 = vld [vmem:[%s3 + $0x28] sm:$0xf]
        %v369 = vld [vmem:[%s3 + $0x2c] sm:$0xf]
        %v370 = vld [vmem:[%s3 + $0x30] sm:$0xf]
        %v371 = vld [vmem:[%s3 + $0x34] sm:$0xf]
        %v372 = vld [vmem:[%s3 + $0x38] sm:$0xf]
        %v373 = vld [vmem:[%s3 + $0x3c] sm:$0xf]
        %v374 = vld [vmem:[%s4] sm:$0x1]
        %v376 = vlaneseq
        %v377 = vshrl.u32 %v376, 7
        %v378 = vsub.s32 0, %v377
        %v379 = vrot.slane %v374, %v378
        %v397 = vunpack.c.l.b16 %v358
        %v398 = vunpack.c.l.b16 %v359
        %v399 = vunpack.c.l.b16 %v360
        %v400 = vunpack.c.l.b16 %v361
        %v401 = vunpack.c.l.b16 %v362
        %v402 = vunpack.c.l.b16 %v363
        %v403 = vunpack.c.l.b16 %v364
        %v404 = vunpack.c.l.b16 %v365
        %v405 = vunpack.c.l.b16 %v366
        %v406 = vunpack.c.l.b16 %v367
        %v407 = vunpack.c.l.b16 %v368
        %v408 = vunpack.c.l.b16 %v369
        %v409 = vunpack.c.l.b16 %v370
        %v410 = vunpack.c.l.b16 %v371
        %v411 = vunpack.c.l.b16 %v372
        %v412 = vunpack.c.l.b16 %v373
        %v413 = vpack.c.b16 %v398, %v397
        %v414 = vpack.c.b16 %v400, %v399
        %v415 = vpack.c.b16 %v402, %v401
        %v416 = vpack.c.b16 %v404, %v403
        %v417 = vpack.c.b16 %v406, %v405
        %v418 = vpack.c.b16 %v408, %v407
        %v419 = vpack.c.b16 %v410, %v409
        %v420 = vpack.c.b16 %v412, %v411
        %429 = vmatprep.subr.bf16.mxu0 0
        %430 = vmatpush1.bf16.msra.mxu0 %v413
        %431 = vmatprep.subr.bf16.mxu0 0
        %432 = vmatpush1.bf16.msra.mxu0 %v414
        %433 = vmatprep.subr.bf16.mxu0 0
        %434 = vmatpush1.bf16.msra.mxu0 %v415
        %435 = vmatprep.subr.bf16.mxu0 0
        %436 = vmatpush1.bf16.msra.mxu0 %v416
        %437 = vmatprep.subr.bf16.mxu0 0
        %438 = vmatpush1.bf16.msra.mxu0 %v417
        %439 = vmatprep.subr.bf16.mxu0 0
        %440 = vmatpush1.bf16.msra.mxu0 %v418
        %441 = vmatprep.subr.bf16.mxu0 0
        %442 = vmatpush1.bf16.msra.mxu0 %v419
        %443 = vmatprep.subr.bf16.mxu0 0
        %444 = vmatpush1.bf16.msra.mxu0 %v420
        %445 = vmatprep.subr.bf16.mxu0 0
        %446 = vmatpush1.bf16.msra.mxu0 0
        %447 = vmatprep.subr.bf16.mxu0 0
        %448 = vmatpush1.bf16.msra.mxu0 0
        %449 = vmatprep.subr.bf16.mxu0 0
        %450 = vmatpush1.bf16.msra.mxu0 0
        %451 = vmatprep.subr.bf16.mxu0 0
        %452 = vmatpush1.bf16.msra.mxu0 0
        %453 = vmatprep.subr.bf16.mxu0 0
        %454 = vmatpush1.bf16.msra.mxu0 0
        %455 = vmatprep.subr.bf16.mxu0 0
        %456 = vmatpush1.bf16.msra.mxu0 0
        %457 = vmatprep.subr.bf16.mxu0 0
        %458 = vmatpush1.bf16.msra.mxu0 0
        %459 = vmatprep.subr.bf16.mxu0 0
        %460 = vmatpush1.bf16.msra.mxu0 0
        %461 = vmatprep.mubr.bf16.mxu0 0
        %462 = vmatmul.mubr.bf16.gmra.mrb[0].mxu0 %v356
        %v463 = vpop.f32.mrb[0].mxu0
        %v464 = vadd.f32 %v379, %v463
        %v465 = vpop.f32.mrb[0].mxu0
        %v466 = vpop.f32.mrb[0].mxu0
        %v467 = vadd.f32 %v379, %v466
        %v468 = vpop.f32.mrb[0].mxu0
        %469 = vmatprep.mubr.bf16.mxu0 0
        %470 = vmatmul.mubr.bf16.gmra.mrb[0].mxu0 %v357
        %v471 = vpop.f32.mrb[0].mxu0
        %v472 = vadd.f32 %v379, %v471
        %v473 = vpop.f32.mrb[0].mxu0
        %v474 = vpop.f32.mrb[0].mxu0
        %v475 = vadd.f32 %v379, %v474
        %v476 = vpop.f32.mrb[0].mxu0
        %477 = vdwg.mxu0
        %v478 = vmul.f32 %v464, 0.5
        %v479 = vmul.f32 %v467, 0.5
        %v480 = vmul.f32 %v472, 0.5
        %v481 = vmul.f32 %v475, 0.5
        %v482 = vtanh.pop %v478
        %v483 = vtanh.pop %v479
        %v484 = vtanh.pop %v480
        %v485 = vtanh.pop %v481
        %v486 = vmul.f32 %v482, 0.5
        %v487 = vmul.f32 %v483, 0.5
        %v488 = vmul.f32 %v484, 0.5
        %v489 = vmul.f32 %v485, 0.5
        %v490 = vadd.f32 %v486, 0.5
        %v491 = vadd.f32 %v487, 0.5
        %v492 = vadd.f32 %v488, 0.5
        %v493 = vadd.f32 %v489, 0.5
        %494 = vst.msk [vmem:[%s230] sm:$0xff] %vm296, %v490
        %495 = vst.msk [vmem:[%s230 + $0x8] sm:$0xff] %vm296, %v491
        %496 = vst.msk [vmem:[%s230 + $0x10] sm:$0xff] %vm296, %v492
        %497 = vst.msk [vmem:[%s230 + $0x18] sm:$0xff] %vm296, %v493
        %s498 = sand.u32 %s137, 1
        %s499 = scalar_lea.sflag [#allocation3], %s498
        %s500 = sand.u32 %s137, 1
        %s501 = smul.addr %s500, 32
        %s502 = scalar_lea.vmem [#allocation2], %s501
        // Predicated region
        $region41: #{tpu_custom_call.1} parent=39 // pred_check
          %p503 = pneg %p147
        $region42: #{tpu_custom_call.1} parent=39 // pred_check_branch
          %505 = sbr.rel (%p503) target = $region44
        $region43: #{tpu_custom_call.1} parent=39 // pred_region
          %s506 = smul.u32 4, %s19
          %s507 = ssub.s32 7, %s506
          %p508 = scmp.lt.s32.totalorder %s507, 4
          %s509 = scalar_select %p508, %s507, 4
          %s510 = smul.u32 128, %s509
          %s512 = ssub.s32 512, %s510
          %513 = vsyncadd %s499, %s512
          %p514 = scmp.ne.s32.totalorder 0, %s510
          %s515 = smul.addr %s506, 128
          %s516 = scalar_lea.hbm %s5, %s515
          %s517 = smul.u32 8, %s509
          %s518 = sshll.u32 %s502, 4
          %s519 = int_to_ptr.vmem [resolvable:$true] %s518
          %s520 = sshll.u32 %s517, 4
          %524 = dma.vmem_to_hbm [thread:$0]  (%p514), %s519, %s520, %s516, %s499, 128, 128, 8
        $region44: #{tpu_custom_call.1} parent=39 // pred_fallthru
          _
      $region40: #{tpu_custom_call.1} parent=5 // pred_fallthru
        _
      %p525 = scmp.le.s32.totalorder 2, %s14
      // Predicated region
      $region45: #{tpu_custom_call.1} parent=5 // pred_check
        %p526 = pneg %p525
      $region46: #{tpu_custom_call.1} parent=5 // pred_check_branch
        %528 = sbr.rel (%p526) target = $region48
      $region47: #{tpu_custom_call.1} parent=5 // pred_region
        %s529 = ssub.s32 %s14, 2
        // Predicated region
        $region49: #{tpu_custom_call.1} parent=47 // pred_check
          %p530 = pneg %p153
        $region50: #{tpu_custom_call.1} parent=47 // pred_check_branch
          %532 = sbr.rel (%p530) target = $region52
        $region51: #{tpu_custom_call.1} parent=47 // pred_region
          %s533 = sand.u32 %s138, 1
          %s534 = scalar_lea.sflag [#allocation3], %s533
          %s535 = sand.u32 %s138, 1
          %s536 = smul.addr %s535, 32
          %s537 = scalar_lea.vmem [#allocation2], %s536
          %538 = dma.done %s534, 512
        $region52: #{tpu_custom_call.1} parent=47 // pred_fallthru
          _
      $region48: #{tpu_custom_call.1} parent=5 // pred_fallthru
        _
    $region6: #{tpu_custom_call.1} parent=1 // loop_footer
      %s18 = sadd.s32 1, %s14
    $region7: #{tpu_custom_call.1} parent=1 // loop_footer_branch
      %13 = sbr.rel target = $region3
    $region8: #{tpu_custom_call.1} parent=1 // loop_exit
      _
    %539 = vsyncpa [#allocation3], 1
    %s540 = scalar_lea.sflag [#allocation3], 1
    %541 = vsyncpa %s540, 1

</llo_original>
